<compile_context>
chip_gen: v5e
topology: v5e:2x2
jax: 0.10.0
libtpu: 0.0.40
codegen_flags: <defaults>
</compile_context>

<pallas_src>
import jax
import jax.numpy as jnp
from jax.experimental import pallas as pl
from jax.experimental.pallas import tpu as pltpu

NEG_SLOPE = 0.01  # nn.LeakyReLU default


def _round_up(n, m):
    return ((n + m - 1) // m) * m


def _pick_tb(h, tb_max, budget_bytes):
    """Largest batch-tile (multiple of 128, <= tb_max) fitting the VMEM budget.

    Budget model: bf16 W1 (double-buffer-safe) + double-buffered bf16 x tile
    + double-buffered f32 out tile.
    """
    tb = max(128, (tb_max // 128) * 128)
    while tb > 128:
        est = 2 * (2 * h * h) + 2 * (2 * h * tb) + 2 * (4 * tb)
        if est <= budget_bytes:
            break
        tb -= 128
    return tb


def _interaction_mlp_kernel(xT_ref, w1_ref, b1_ref, w2_ref, b2_ref, o_ref):
    # xT_ref: (H, TB) bf16   -- batch on the lane axis
    # w1_ref: (H, H)  bf16   -- PyTorch layout (out, in), VMEM-resident
    # b1_ref: (H, 1)  f32    -- VMEM-resident bias column
    # w2_ref: (H, 1)  f32    -- VMEM-resident column (second Linear weight^T)
    # b2_ref: (1,)    f32    -- SMEM scalar
    # o_ref:  (1, TB) f32    -- lane-dense output tile

    # Linear(H, H): h^T = W1 @ x^T  (MXU, bf16 inputs, f32 accumulation).
    hT = jnp.dot(w1_ref[...], xT_ref[...], preferred_element_type=jnp.float32)
    hT = hT + b1_ref[...]  # lane-broadcast of the (H, 1) bias column

    # Dropout(0.1): identity in eval mode.
    # TODO(synk): training-mode dropout mask not emitted.

    # LeakyReLU (negative_slope = 0.01), f32 on the VPU.
    hT = jnp.where(hT > 0, hT, NEG_SLOPE * hT)

    # Linear(H, 1): VPU multiply by w2 column + sublane (XLU) reduction over H.
    y = jnp.sum(hT * w2_ref[...], axis=0, keepdims=True) + b2_ref[0]  # (1, TB)

    # Sigmoid: exp on the EUP, reciprocal via EUP vrcp (approx) -- VALU-free.
    o_ref[...] = pl.reciprocal(1.0 + jnp.exp(-y), approx=True)


def interaction_mlp_forward(x, w1_oi, b1_col, w2_col, b2, *,
                            tb_max=2048, vmem_budget=24 * 1024 * 1024):
    """Forward pass of InteractionMLP (eval mode).

    x:      (B, 1, H) or (B, H) float32
    w1_oi:  (H, H) float32, PyTorch layout (out, in)
    b1_col: (H, 1) float32
    w2_col: (H, 1) float32  (= second Linear weight (1, H) transposed)
    b2:     (1,)   float32
    Returns (B, 1) float32.
    """
    if x.ndim == 3:
        x = jnp.squeeze(x, axis=1)
    B, H = x.shape

    # Batch tile: multiple of 128 (lane-dense, (8,128)-legal), VMEM-budgeted.
    tb_cap = _pick_tb(H, tb_max, vmem_budget)
    b_pad128 = _round_up(B, 128)
    if b_pad128 <= tb_cap:
        TB = b_pad128
        B_pad = b_pad128
    else:
        TB = tb_cap
        B_pad = _round_up(B, TB)

    # Transposed, bf16 activations: batch on the lane axis, lane-dense output.
    xT = jnp.transpose(x).astype(jnp.bfloat16)          # (H, B)
    if B_pad != B:
        xT = jnp.pad(xT, ((0, 0), (0, B_pad - B)))
    w1_bf = w1_oi.astype(jnp.bfloat16)

    grid = (B_pad // TB,)

    out = pl.pallas_call(
        _interaction_mlp_kernel,
        out_shape=jax.ShapeDtypeStruct((1, B_pad), jnp.float32),
        grid_spec=pltpu.PrefetchScalarGridSpec(
            num_scalar_prefetch=0,
            grid=grid,
            in_specs=[
                pl.BlockSpec((H, TB), lambda i: (0, i)),   # x^T tile (pipelined)
                pl.BlockSpec((H, H), lambda i: (0, 0)),    # W1: resident
                pl.BlockSpec((H, 1), lambda i: (0, 0)),    # b1: resident
                pl.BlockSpec((H, 1), lambda i: (0, 0)),    # w2: resident
                pl.BlockSpec(memory_space=pltpu.MemorySpace.SMEM),  # b2 scalar
            ],
            out_specs=pl.BlockSpec((1, TB), lambda i: (0, i)),
        ),
        compiler_params=pltpu.CompilerParams(
            dimension_semantics=("parallel",),      # shard batch tiles across TCs (v7x)
            vmem_limit_bytes=64 * 1024 * 1024,      # explicit scoped budget
        ),
    )(xT, w1_bf, b1_col, w2_col, b2)

    return out[0, :B].reshape(B, 1)


def init_params(h, key):
    """Deterministic synthetic params (Xavier-uniform style), kernel layout."""
    k1, k2, k3, k4 = jax.random.split(key, 4)
    lim1 = (6.0 / (h + h)) ** 0.5
    lim2 = (6.0 / (h + 1)) ** 0.5
    w1_oi = jax.random.uniform(k1, (h, h), jnp.float32, -lim1, lim1)   # (out, in)
    b1_col = jax.random.uniform(k2, (h, 1), jnp.float32, -0.01, 0.01)
    w2_col = jax.random.uniform(k3, (h, 1), jnp.float32, -lim2, lim2)  # (in, 1)
    b2 = jax.random.uniform(k4, (1,), jnp.float32, -0.01, 0.01)
    return w1_oi, b1_col, w2_col, b2


def _reference(x, w1_oi, b1_col, w2_col, b2):
    """Pure-JAX f32 reference of the PyTorch module (eval mode)."""
    if x.ndim == 3:
        x = jnp.squeeze(x, axis=1)
    h = x @ w1_oi.T + b1_col[:, 0]
    h = jnp.where(h > 0, h, NEG_SLOPE * h)
    y = h @ w2_col + b2[0]
    return jax.nn.sigmoid(y)


if __name__ == "__main__":
    key = jax.random.PRNGKey(0)

    # --- small demo shape consistent with the module: binding_complex B x 1 x H
    B, H = 8, 32
    kx, kp, kx2, kp2 = jax.random.split(key, 4)
    x = jax.random.normal(kx, (B, 1, H), jnp.float32)
    w1, b1, w2, b2 = init_params(H, kp)

    yhat = interaction_mlp_forward(x, w1, b1, w2, b2)
    yhat = jax.block_until_ready(yhat)
    ref = _reference(x, w1, b1, w2, b2)
    assert yhat.shape == (B, 1)
    assert jnp.allclose(yhat, ref, atol=2e-2, rtol=0.0), "small-shape mismatch"

    # --- larger shape exercising the batch tiling / padding path (grid > 1)
    B2, H2 = 5000, 128
    x2 = jax.random.normal(kx2, (B2, 1, H2), jnp.float32)
    w1b, b1b, w2b, b2b = init_params(H2, kp2)
    yhat2 = interaction_mlp_forward(x2, w1b, b1b, w2b, b2b)
    yhat2 = jax.block_until_ready(yhat2)
    ref2 = _reference(x2, w1b, b1b, w2b, b2b)
    assert yhat2.shape == (B2, 1)
    assert jnp.allclose(yhat2, ref2, atol=2e-2, rtol=0.0), "tiled-shape mismatch"

    print("KERNEL_OK")
</pallas_src>

<mosaic_0001>
module attributes {stable_mosaic.version = 11 : i64} {
  func.func @_interaction_mlp_kernel(%arg0: i32, %arg1: memref<32x128xbf16, #tpu.memory_space<vmem>>, %arg2: memref<32x32xbf16, #tpu.memory_space<vmem>>, %arg3: memref<32x1xf32, #tpu.memory_space<vmem>>, %arg4: memref<32x1xf32, #tpu.memory_space<vmem>>, %arg5: memref<1xf32, #tpu.memory_space<smem>>, %arg6: memref<1x128xf32, #tpu.memory_space<vmem>>) attributes {dimension_semantics = [#tpu.dimension_semantics<parallel>], iteration_bounds = array<i64: 1>, scalar_prefetch = 0 : i64, scratch_operands = 0 : i64, tpu.core_type = #tpu.core_type<tc>, window_params = [{transform_indices = @transform_0, window_bounds = array<i64: 32, 128>}, {pipeline_mode = #tpu.pipeline_mode<synchronous>, transform_indices = @transform_1, window_bounds = array<i64: 32, 32>}, {pipeline_mode = #tpu.pipeline_mode<synchronous>, transform_indices = @transform_2, window_bounds = array<i64: 32, 1>}, {pipeline_mode = #tpu.pipeline_mode<synchronous>, transform_indices = @transform_3, window_bounds = array<i64: 32, 1>}, {transform_indices = @transform_4, window_bounds = array<i64: 1>}, {transform_indices = @transform_5, window_bounds = array<i64: 1, 128>}]} {
    %c0 = arith.constant 0 : index
    %c0_0 = arith.constant 0 : index
    %0 = vector.load %arg2[%c0, %c0_0] : memref<32x32xbf16, #tpu.memory_space<vmem>>, vector<32x32xbf16>
    %c0_1 = arith.constant 0 : index
    %c0_2 = arith.constant 0 : index
    %1 = vector.load %arg1[%c0_1, %c0_2] : memref<32x128xbf16, #tpu.memory_space<vmem>>, vector<32x128xbf16>
    %cst = arith.constant dense<0.000000e+00> : vector<32x128xf32>
    %2 = tpu.matmul %0, %1, %cst {dimension_numbers = #tpu.dot_dimension_numbers<[1], [0], [0], [1], [0, 0, 1, 1], [], []>} : vector<32x32xbf16>, vector<32x128xbf16>, vector<32x128xf32> -> vector<32x128xf32>
    %c0_3 = arith.constant 0 : index
    %c0_4 = arith.constant 0 : index
    %3 = vector.load %arg3[%c0_3, %c0_4] : memref<32x1xf32, #tpu.memory_space<vmem>>, vector<32x1xf32>
    %4 = vector.broadcast %3 : vector<32x1xf32> to vector<32x128xf32>
    %5 = arith.addf %2, %4 : vector<32x128xf32>
    %cst_5 = arith.constant 0.000000e+00 : f32
    %6 = vector.broadcast %cst_5 : f32 to vector<32x128xf32>
    %7 = arith.cmpf ogt, %5, %6 : vector<32x128xf32>
    %cst_6 = arith.constant 0.00999999977 : f32
    %8 = vector.broadcast %cst_6 : f32 to vector<32x128xf32>
    %9 = arith.mulf %8, %5 : vector<32x128xf32>
    %10 = arith.select %7, %5, %9 : vector<32x128xi1>, vector<32x128xf32>
    %c0_7 = arith.constant 0 : index
    %c0_8 = arith.constant 0 : index
    %11 = vector.load %arg4[%c0_7, %c0_8] : memref<32x1xf32, #tpu.memory_space<vmem>>, vector<32x1xf32>
    %12 = vector.broadcast %11 : vector<32x1xf32> to vector<32x128xf32>
    %13 = arith.mulf %10, %12 : vector<32x128xf32>
    %cst_9 = arith.constant dense<0.000000e+00> : vector<128xf32>
    %14 = vector.multi_reduction <add>, %13, %cst_9 [0] : vector<32x128xf32> to vector<128xf32>
    %15 = vector.shape_cast %14 : vector<128xf32> to vector<1x128xf32>
    %c0_10 = arith.constant 0 : index
    %16 = memref.load %arg5[%c0_10] : memref<1xf32, #tpu.memory_space<smem>>
    %17 = vector.broadcast %16 : f32 to vector<1x128xf32>
    %18 = arith.addf %15, %17 : vector<1x128xf32>
    %cst_11 = arith.constant 0.000000e+00 : f32
    %19 = vector.broadcast %cst_11 : f32 to vector<1x128xf32>
    %20 = arith.subf %19, %18 : vector<1x128xf32>
    %21 = math.exp %20 : vector<1x128xf32>
    %cst_12 = arith.constant 1.000000e+00 : f32
    %22 = vector.broadcast %cst_12 : f32 to vector<1x128xf32>
    %23 = arith.addf %22, %21 : vector<1x128xf32>
    %24 = tpu.reciprocal %23 {approx = true} : vector<1x128xf32> -> vector<1x128xf32>
    %c0_13 = arith.constant 0 : index
    %c0_14 = arith.constant 0 : index
    %25 = vector.load %arg6[%c0_13, %c0_14] : memref<1x128xf32, #tpu.memory_space<vmem>>, vector<1x128xf32>
    tpu.vector_store %arg6[%c0_13, %c0_14], %24 {strides = array<i32>} : memref<1x128xf32, #tpu.memory_space<vmem>>, vector<1x128xf32>,
    return
  }
  func.func @transform_0(%arg0: i32) -> (i32, i32) {
    %c0_i32 = arith.constant 0 : i32
    %c0_i32_0 = arith.constant 0 : i32
    return %c0_i32, %arg0 : i32, i32
  }
  func.func @transform_1(%arg0: i32) -> (i32, i32) {
    %c0_i32 = arith.constant 0 : i32
    %c0_i32_0 = arith.constant 0 : i32
    %c0_i32_1 = arith.constant 0 : i32
    return %c0_i32, %c0_i32_0 : i32, i32
  }
  func.func @transform_2(%arg0: i32) -> (i32, i32) {
    %c0_i32 = arith.constant 0 : i32
    %c0_i32_0 = arith.constant 0 : i32
    %c0_i32_1 = arith.constant 0 : i32
    return %c0_i32, %c0_i32_0 : i32, i32
  }
  func.func @transform_3(%arg0: i32) -> (i32, i32) {
    %c0_i32 = arith.constant 0 : i32
    %c0_i32_0 = arith.constant 0 : i32
    %c0_i32_1 = arith.constant 0 : i32
    return %c0_i32, %c0_i32_0 : i32, i32
  }
  func.func @transform_4(%arg0: i32) -> i32 {
    %c0_i32 = arith.constant 0 : i32
    %c0_i32_0 = arith.constant 0 : i32
    return %c0_i32 : i32
  }
  func.func @transform_5(%arg0: i32) -> (i32, i32) {
    %c0_i32 = arith.constant 0 : i32
    %c0_i32_0 = arith.constant 0 : i32
    return %c0_i32, %arg0 : i32, i32
  }
}

</mosaic_0001>

<llo_original>
// kernel: tpu_custom_call.1
$region0: #{tpu_custom_call.1}
  #allocation0 [shape = 'u32[]', space=smem, size = 0x4, offset = 0x4, fixed_abs, tag = 'smem constant byte address 0x4 - core index']
  #allocation1 [shape = 'u32[72,128]{1,0:T(1,128)}', space=vmem, size = 0x9000, scoped, tag = 'internal scratch']
  #allocation2 [shape = 'f32[1]{0:T(128)S(6)}', space=smem, size = 0x200, scoped, tag = 'scoped memory for tpu_custom_call.1']
  %s0 = inlined_call_operand.vmem [shape: bf16[32,128], index: 0, kind: input, shape index: {}]
  %s1 = inlined_call_operand.vmem [shape: bf16[32,32], index: 1, kind: input, shape index: {}]
  %s2 = inlined_call_operand.vmem [shape: f32[32,1], index: 2, kind: input, shape index: {}]
  %s3 = inlined_call_operand.vmem [shape: f32[32,1], index: 3, kind: input, shape index: {}]
  %s4 = inlined_call_operand.<no memory space> [shape: f32[1], index: 4, kind: input, shape index: {}]
  %s5 = inlined_call_operand.hbm [shape: f32[1,128], index: 5, kind: output, shape index: {}]
  %s6 = sld [smem:[#allocation0]]
  $region30: #{tpu_custom_call.1} parent=0
    _
  %s8 = ssub.s32 1, %s6
  %s9 = scalar_select 0, %s8, %s6
  %10 = sst [smem:[#allocation2]] %s4
  $region1: #{tpu_custom_call.1} parent=0
    #allocation3 [shape = 'u8[512]{0}', space=vmem, size = 0x400, scoped, tag = 'output window, operand 0, single buffered']
    #allocation4 [shape = 's32[1]{0}', space=sflag, size = 0x4, scoped, tag = 'scoped memory for tpu_custom_call.1']
    %11 = vsyncpa [#allocation4], 0
    // Predicated region
    $region2: #{tpu_custom_call.1} parent=1 // pred_check
      _
    $region3: #{tpu_custom_call.1} parent=1 // pred_check_branch
      %13 = sbr.rel (0) target = $region5
    $region4: #{tpu_custom_call.1} parent=1 // pred_region
      _
    $region5: #{tpu_custom_call.1} parent=1 // pred_fallthru
      _
    // Predicated region
    $region6: #{tpu_custom_call.1} parent=1 // pred_check
      _
    $region7: #{tpu_custom_call.1} parent=1 // pred_check_branch
      %15 = sbr.rel (0) target = $region9
    $region8: #{tpu_custom_call.1} parent=1 // pred_region
      _
    $region9: #{tpu_custom_call.1} parent=1 // pred_fallthru
      _
    // Predicated region
    $region10: #{tpu_custom_call.1} parent=1 // pred_check
      _
    $region11: #{tpu_custom_call.1} parent=1 // pred_check_branch
      %17 = sbr.rel (0) target = $region13
    $region12: #{tpu_custom_call.1} parent=1 // pred_region
      _
    $region13: #{tpu_custom_call.1} parent=1 // pred_fallthru
      _
    // Predicated region
    $region14: #{tpu_custom_call.1} parent=1 // pred_check
      _
    $region15: #{tpu_custom_call.1} parent=1 // pred_check_branch
      %19 = sbr.rel (0) target = $region17
    $region16: #{tpu_custom_call.1} parent=1 // pred_region
      _
    $region17: #{tpu_custom_call.1} parent=1 // pred_fallthru
      _
    // Predicated region
    $region18: #{tpu_custom_call.1} parent=1 // pred_check
      _
    $region19: #{tpu_custom_call.1} parent=1 // pred_check_branch
      %21 = sbr.rel (0) target = $region21
    $region20: #{tpu_custom_call.1} parent=1 // pred_region
      _
    $region21: #{tpu_custom_call.1} parent=1 // pred_fallthru
      _
    %v23 = vld [vmem:[%s1] sm:$0xf]
    %v24 = vld [vmem:[%s1 + $0x4] sm:$0xf]
    %v25 = vld [vmem:[%s1 + $0x8] sm:$0xf]
    %v26 = vld [vmem:[%s1 + $0xc] sm:$0xf]
    %v27 = vld [vmem:[%s0] sm:$0xf]
    %v28 = vld [vmem:[%s0 + $0x4] sm:$0xf]
    %v29 = vld [vmem:[%s0 + $0x8] sm:$0xf]
    %v30 = vld [vmem:[%s0 + $0xc] sm:$0xf]
    %v31 = vld [vmem:[%s2] sm:$0xff]
    %v32 = vld [vmem:[%s2 + $0x8] sm:$0xff]
    %v33 = vld [vmem:[%s2 + $0x10] sm:$0xff]
    %v34 = vld [vmem:[%s2 + $0x18] sm:$0xff]
    %36 = vset.pattern.permute.xlu0 0
    %37 = vperm.xlu0 %36, %v31
    %v38 = vpop.permute.xlu0 %37
    %41 = vset.pattern.permute.xlu0 0
    %42 = vperm.xlu0 %41, %v32
    %v43 = vpop.permute.xlu0 %42
    %46 = vset.pattern.permute.xlu0 0
    %47 = vperm.xlu0 %46, %v33
    %v48 = vpop.permute.xlu0 %47
    %51 = vset.pattern.permute.xlu0 0
    %52 = vperm.xlu0 %51, %v34
    %v53 = vpop.permute.xlu0 %52
    %v59 = vunpack.c.l.b16 %v23
    %v60 = vunpack.c.l.b16 %v24
    %v61 = vunpack.c.l.b16 %v25
    %v62 = vunpack.c.l.b16 %v26
    %v63 = vpack.c.b16 %v60, %v59
    %v64 = vpack.c.b16 %v62, %v61
    %v69 = vunpack.c.l.b16 %v27
    %v70 = vunpack.c.l.b16 %v28
    %v71 = vunpack.c.l.b16 %v29
    %v72 = vunpack.c.l.b16 %v30
    %v73 = vpack.c.b16 %v70, %v69
    %v74 = vpack.c.b16 %v72, %v71
    %vm77 = vcmask 261120
    %v79 = vsel %vm77, %v63, 0
    %v82 = vsel %vm77, %v64, 0
    %84 = vmatpush.bf16.msra.mxu0 0
    %85 = vmatpush.bf16.msra.mxu0 0
    %86 = vmatpush.bf16.msra.mxu0 0
    %87 = vmatpush.bf16.msra.mxu0 0
    %88 = vmatpush.bf16.msra.mxu0 0
    %89 = vmatpush.bf16.msra.mxu0 0
    %90 = vmatpush.bf16.msra.mxu0 %v74
    %91 = vmatpush.bf16.msra.mxu0 %v73
    %92 = vmatmul.bf16.gmra.mxu0 %v79
    %v93 = vpop.f32.mrf.mxu0
    %v94 = vadd.f32 %v38, %v93
    %v95 = vpop.f32.mrf.mxu0
    %v96 = vadd.f32 %v43, %v95
    %97 = vmatmul.bf16.gmra.mxu0 %v82
    %v98 = vpop.f32.mrf.mxu0
    %v99 = vadd.f32 %v48, %v98
    %v100 = vpop.f32.mrf.mxu0
    %v101 = vadd.f32 %v53, %v100
    %102 = vdwg.mxu0
    %vm103 = vcmp.gt.f32.partialorder %v94, 0.0
    %vm104 = vcmp.gt.f32.partialorder %v96, 0.0
    %vm105 = vcmp.gt.f32.partialorder %v99, 0.0
    %vm106 = vcmp.gt.f32.partialorder %v101, 0.0
    %v107 = vmul.f32 %v94, 0.01
    %v108 = vmul.f32 %v96, 0.01
    %v109 = vmul.f32 %v99, 0.01
    %v110 = vmul.f32 %v101, 0.01
    %v111 = vsel %vm103, %v94, %v107
    %v112 = vsel %vm104, %v96, %v108
    %v113 = vsel %vm105, %v99, %v109
    %v114 = vsel %vm106, %v101, %v110
    %v115 = vld [vmem:[%s3] sm:$0xff]
    %v116 = vld [vmem:[%s3 + $0x8] sm:$0xff]
    %v117 = vld [vmem:[%s3 + $0x10] sm:$0xff]
    %v118 = vld [vmem:[%s3 + $0x18] sm:$0xff]
    %120 = vset.pattern.permute.xlu0 0
    %121 = vperm.xlu0 %120, %v115
    %v122 = vpop.permute.xlu0 %121
    %125 = vset.pattern.permute.xlu0 0
    %126 = vperm.xlu0 %125, %v116
    %v127 = vpop.permute.xlu0 %126
    %130 = vset.pattern.permute.xlu0 0
    %131 = vperm.xlu0 %130, %v117
    %v132 = vpop.permute.xlu0 %131
    %135 = vset.pattern.permute.xlu0 0
    %136 = vperm.xlu0 %135, %v118
    %v137 = vpop.permute.xlu0 %136
    %v139 = vmul.f32 %v111, %v122
    %v140 = vmul.f32 %v112, %v127
    %v141 = vmul.f32 %v113, %v132
    %v142 = vmul.f32 %v114, %v137
    %v143 = vadd.f32 %v139, %v140
    %v144 = vadd.f32 %v143, %v141
    %v145 = vadd.f32 %v144, %v142
    %v146 = vrot.slane %v145, 4
    %v147 = vadd.f32 %v145, %v146
    %v148 = vrot.slane %v147, 2
    %v149 = vadd.f32 %v147, %v148
    %v150 = vrot.slane %v149, 1
    %v151 = vadd.f32 %v149, %v150
    %s152 = sld [smem:[#allocation2]]
    %v153 = vstv %s152
    %v154 = vadd.f32 %v151, %v153
    %v155 = vsub.f32 0.0, %v154
    %v156 = vmul.f32 %v155, 1.442695
    %v157 = vpow.pop %v156
    %v158 = vadd.f32 %v157, 1.0
    %v159 = vrcp.pop %v158
    %160 = vst [vmem:[#allocation3] sm:$0x1] %v159
    // Predicated region
    $region22: #{tpu_custom_call.1} parent=1 // pred_check
      _
    $region23: #{tpu_custom_call.1} parent=1 // pred_check_branch
      %162 = sbr.rel (0) target = $region25
    $region24: #{tpu_custom_call.1} parent=1 // pred_region
      %164 = vsyncadd [#allocation4], 0
      %s166 = sshll.u32 [#allocation3], 4
      %s167 = int_to_ptr.vmem [resolvable:$true] %s166
      %s168 = sshll.u32 %s5, 4
      %s169 = int_to_ptr.hbm [resolvable:$true] %s168
      %171 = dma.vmem_to_hbm [thread:$0]  %s167, 16, %s169, [#allocation4]
    $region25: #{tpu_custom_call.1} parent=1 // pred_fallthru
      _
    // Predicated region
    $region26: #{tpu_custom_call.1} parent=1 // pred_check
      _
    $region27: #{tpu_custom_call.1} parent=1 // pred_check_branch
      %173 = sbr.rel (0) target = $region29
    $region28: #{tpu_custom_call.1} parent=1 // pred_region
      %175 = dma.done [#allocation4], 16
    $region29: #{tpu_custom_call.1} parent=1 // pred_fallthru
      _
    %176 = vsyncpa [#allocation4], 1

</llo_original>
